<compile_context>
chip_gen: v5e
topology: v5e:2x2
jax: 0.10.0
libtpu: 0.0.40
codegen_flags: <defaults>
</compile_context>

<pallas_src>
import functools
import numpy as np
import jax
import jax.numpy as jnp
from jax.experimental import pallas as pl
from jax.experimental.pallas import tpu as pltpu


def _round_up(x, m):
    return ((x + m - 1) // m) * m


def _upsample_poly_kernel(x_ref, w_ref, b_ref, o_ref, *, row_offs, tlb, neg_slope):
    # x_ref: (1, L_xpad, C_in)  zero-row-padded raw input, channels-last (pre-activation)
    # w_ref: (S, C_in, PC)      per-shift weights, phases folded into PC = stride*C_out
    # b_ref: (1, PC)            bias tiled across phases
    # o_ref: (1, tlb, PC)       phase-folded output tile
    t = pl.program_id(1)
    base = pl.multiple_of(t * tlb, tlb)            # tlb is a multiple of 8
    pc = o_ref.shape[-1]
    # bias-initialized accumulator: saves a zeros pass + a separate bias-add epilogue
    acc = jnp.broadcast_to(b_ref[...].astype(jnp.float32), (tlb, pc))
    for si, off in enumerate(row_offs):            # static unroll, ~ceil(K/stride)+1 shifts
        xs = x_ref[0, pl.ds(base + off, tlb), :]
        xa = jnp.where(xs >= 0, xs, neg_slope * xs)   # LeakyReLU(0.2); leaky(0)=0 -> zero-pad rows are safe
        # TODO(synk): at production channel widths cast xa / w to bf16 here (v6e/v7x MXU),
        # keeping preferred_element_type=f32; kept f32 for exactness at these test shapes.
        acc = acc + jnp.dot(xa, w_ref[si], preferred_element_type=jnp.float32)
    o_ref[0] = acc.astype(o_ref.dtype)


def upsampling_layer(x_ncl, v, g, bias, *, kernel_size, stride, padding,
                     out_pad=0, neg_slope=0.2):
    """Forward of UpSamplingLayer.  x_ncl: (N, C_in, L_in) -> (N, C_out, L_out)."""
    N, C_in, L_in = x_ncl.shape
    K = kernel_size
    C_out = v.shape[1]
    assert v.shape == (C_in, C_out, K)
    # TODO(synk): padding > kernel_size - 1 (i.e. output cropping) not handled.
    assert 0 <= padding <= K - 1
    assert 0 <= out_pad < max(stride, 1)

    L_out = (L_in - 1) * stride - 2 * padding + K + out_pad

    # ---- parameter setup (glue): weight_norm with dim=0 (PyTorch semantics, no eps) ----
    v32 = v.astype(jnp.float32)
    norm = jnp.sqrt(jnp.sum(v32 ** 2, axis=(1, 2), keepdims=True))
    w = (g.astype(jnp.float32)[:, None, None] * v32) / norm       # (C_in, C_out, K)

    # ---- polyphase constants (Python ints, trace-time) ----
    # output t: u = t + padding, phase r = u % stride, m = u // stride
    #   y[t] = sum_j x[m - j] @ w[:, :, r + j*stride]   (taps with r + j*stride < K)
    # With t = mb*stride + phi:  m = mb + d[phi],  d[phi] = (phi+padding)//stride.
    S = stride
    Jmax = -(-K // S)                                 # ceil(K / stride)
    d = [(phi + padding) // S for phi in range(S)]
    r = [(phi + padding) % S for phi in range(S)]
    min_d, max_d = min(d), max(d)

    def taps_for_shift(s):                            # per phase: tap index k or None
        taps = []
        for phi in range(S):
            j = d[phi] - s
            k = r[phi] + j * S
            taps.append(k if (j >= 0 and 0 <= k < K) else None)
        return taps

    shifts, shift_taps = [], []
    for s in range(min_d - (Jmax - 1), max_d + 1):
        taps = taps_for_shift(s)
        if any(k is not None for k in taps):          # skip structurally-zero shifts
            shifts.append(s)
            shift_taps.append(taps)
    n_shifts = len(shifts)
    PC = S * C_out

    # folded per-shift weights: W[si, ci, phi*C_out + co] = w[ci, co, k(si,phi)] (or 0)
    zero_co = jnp.zeros((C_in, C_out), jnp.float32)
    w_parts = []
    for taps in shift_taps:
        cols = [w[:, :, k] if k is not None else zero_co for k in taps]
        w_parts.append(jnp.concatenate(cols, axis=1))               # (C_in, PC)
    w_all = jnp.stack(w_parts, axis=0)                              # (n_shifts, C_in, PC)

    bias_pc = jnp.tile(bias.astype(jnp.float32).reshape(1, C_out), (1, S))   # (1, PC)

    # ---- output tiling along the phase-folded row axis ----
    Lb = -(-L_out // S)                               # ceil(L_out / stride)
    lane_pc = _round_up(PC, 128)
    # keep the f32 accumulator's vreg-padded footprint <= ~128 KiB (half the vreg file)
    tlb_max = max(8, (131072 // (4 * lane_pc)) // 8 * 8)
    TLb = min(_round_up(Lb, 8), tlb_max, 512)
    Lb_pad = _round_up(Lb, TLb)
    n_tiles = Lb_pad // TLb

    # ---- input prep (glue): NCL -> NLC + zero-pad rows so every shifted slice is in range
    x_nlc = jnp.transpose(x_ncl, (0, 2, 1))                          # (N, L_in, C_in)
    pad_l = max(0, -min(shifts))
    pad_r = max(0, (Lb_pad - 1 + max(shifts)) - (L_in - 1))
    x_pad = jnp.pad(x_nlc, ((0, 0), (pad_l, pad_r), (0, 0)))
    L_xpad = L_in + pad_l + pad_r
    row_offs = tuple(s + pad_l for s in shifts)                      # slice start per shift

    kernel = functools.partial(_upsample_poly_kernel, row_offs=row_offs,
                               tlb=TLb, neg_slope=neg_slope)

    # explicit VMEM budget: 2x (x block) + 2x (weights) + 2x (bias) + 2x (out tile) + acc
    vmem_est = (2 * L_xpad * C_in + 2 * n_shifts * C_in * PC + 2 * PC
                + 2 * TLb * PC + TLb * lane_pc) * 4
    vmem_limit = int(min(max(4 * vmem_est, 8 << 20), 32 << 20))

    out_folded = pl.pallas_call(
        kernel,
        out_shape=jax.ShapeDtypeStruct((N, Lb_pad, PC), x_ncl.dtype),
        grid_spec=pltpu.PrefetchScalarGridSpec(
            num_scalar_prefetch=0,
            grid=(N, n_tiles),
            in_specs=[
                # full padded sample; block index depends only on n -> fetched once per sample
                pl.BlockSpec((1, L_xpad, C_in), lambda n, t: (n, 0, 0)),
                pl.BlockSpec((n_shifts, C_in, PC), lambda n, t: (0, 0, 0)),
                pl.BlockSpec((1, PC), lambda n, t: (0, 0)),
            ],
            out_specs=pl.BlockSpec((1, TLb, PC), lambda n, t: (n, t, 0)),
        ),
        compiler_params=pltpu.CompilerParams(
            dimension_semantics=("parallel", "parallel"),
            vmem_limit_bytes=vmem_limit),
    )(x_pad, w_all, bias_pc)

    # phase interleave: (N, Lb_pad, stride, C_out) -> (N, Lb_pad*stride, C_out) is a
    # contiguous reshape; then crop to L_out and return NCL.
    out_nlc = out_folded.reshape(N, Lb_pad * S, C_out)[:, :L_out, :]
    return jnp.transpose(out_nlc, (0, 2, 1))


if __name__ == "__main__":
    def torch_ref(x, v, g, b, K, stride, padding, out_pad, neg_slope=0.2):
        # pure-numpy reference of the PyTorch forward (LeakyReLU + weight-normed ConvTranspose1d)
        xn, vn, gn, bn = map(np.asarray, (x, v, g, b))
        N, C_in, L_in = xn.shape
        C_out = vn.shape[1]
        norm = np.sqrt((vn ** 2).sum(axis=(1, 2), keepdims=True))
        wn = gn[:, None, None] * vn / norm
        xa = np.where(xn >= 0, xn, neg_slope * xn)
        L_out = (L_in - 1) * stride - 2 * padding + K + out_pad
        ref = np.zeros((N, C_out, L_out), np.float32)
        for i in range(L_in):
            for k in range(K):
                t = i * stride - padding + k
                if 0 <= t < L_out:
                    ref[:, :, t] += np.einsum("nc,cd->nd", xa[:, :, i], wn[:, :, k])
        return ref + bn[None, :, None]

    configs = [
        # (N, C_in, C_out, L_in, K, stride, padding, out_pad)
        (2, 8, 16, 16, 4, 2, 1, 0),    # ConvTranspose1d(8 -> 16, k=4, s=2, p=1)
        (2, 16, 8, 12, 5, 3, 2, 1),    # odd kernel/stride + output_padding
    ]
    key = jax.random.PRNGKey(0)
    for (N, C_in, C_out, L_in, K, stride, padding, out_pad) in configs:
        key, kx, kv, kg, kb = jax.random.split(key, 5)
        x = jax.random.normal(kx, (N, C_in, L_in), jnp.float32)
        v = jax.random.normal(kv, (C_in, C_out, K), jnp.float32) * 0.1    # weight_norm "v"
        g = jax.random.uniform(kg, (C_in,), jnp.float32, 0.5, 1.5)         # weight_norm "g"
        b = jax.random.normal(kb, (C_out,), jnp.float32) * 0.1             # conv bias

        out = upsampling_layer(x, v, g, b, kernel_size=K, stride=stride,
                               padding=padding, out_pad=out_pad)
        out = jax.block_until_ready(out)

        ref = torch_ref(x, v, g, b, K, stride, padding, out_pad)
        assert out.shape == ref.shape, (out.shape, ref.shape)
        np.testing.assert_allclose(np.asarray(out), ref, rtol=1e-4, atol=1e-4)

    print("KERNEL_OK")
</pallas_src>

<mosaic_0001>
module attributes {stable_mosaic.version = 11 : i64} {
  func.func @_upsample_poly_kernel(%arg0: i32, %arg1: i32, %arg2: memref<1x18x8xf32, #tpu.memory_space<vmem>>, %arg3: memref<3x8x32xf32, #tpu.memory_space<vmem>>, %arg4: memref<1x32xf32, #tpu.memory_space<vmem>>, %arg5: memref<1x16x32xf32, #tpu.memory_space<vmem>>) attributes {dimension_semantics = [#tpu.dimension_semantics<parallel>, #tpu.dimension_semantics<parallel>], iteration_bounds = array<i64: 2, 1>, scalar_prefetch = 0 : i64, scratch_operands = 0 : i64, tpu.core_type = #tpu.core_type<tc>, window_params = [{transform_indices = @transform_0, window_bounds = array<i64: 1, 18, 8>}, {pipeline_mode = #tpu.pipeline_mode<synchronous>, transform_indices = @transform_1, window_bounds = array<i64: 3, 8, 32>}, {pipeline_mode = #tpu.pipeline_mode<synchronous>, transform_indices = @transform_2, window_bounds = array<i64: 1, 32>}, {transform_indices = @transform_3, window_bounds = array<i64: 1, 16, 32>}]} {
    %c16_i32 = arith.constant 16 : i32
    %0 = arith.muli %arg1, %c16_i32 : i32
    %1 = tpu.assume_multiple %0, 16 : i32
    %c0 = arith.constant 0 : index
    %c0_0 = arith.constant 0 : index
    %2 = vector.load %arg4[%c0, %c0_0] : memref<1x32xf32, #tpu.memory_space<vmem>>, vector<1x32xf32>
    %3 = vector.shape_cast %2 : vector<1x32xf32> to vector<1x32xf32>
    %4 = vector.broadcast %3 : vector<1x32xf32> to vector<16x32xf32>
    %c0_i32 = arith.constant 0 : i32
    %5 = arith.addi %1, %c0_i32 : i32
    %c0_1 = arith.constant 0 : index
    %6 = arith.index_cast %5 : i32 to index
    %c0_2 = arith.constant 0 : index
    %7 = vector.load %arg2[%c0_1, %6, %c0_2] : memref<1x18x8xf32, #tpu.memory_space<vmem>>, vector<1x16x8xf32>
    %8 = vector.shape_cast %7 : vector<1x16x8xf32> to vector<16x8xf32>
    %cst = arith.constant 0.000000e+00 : f32
    %9 = vector.broadcast %cst : f32 to vector<16x8xf32>
    %10 = arith.cmpf oge, %8, %9 : vector<16x8xf32>
    %cst_3 = arith.constant 2.000000e-01 : f32
    %11 = vector.broadcast %cst_3 : f32 to vector<16x8xf32>
    %12 = arith.mulf %11, %8 : vector<16x8xf32>
    %13 = arith.select %10, %8, %12 : vector<16x8xi1>, vector<16x8xf32>
    %c0_4 = arith.constant 0 : index
    %c0_5 = arith.constant 0 : index
    %c0_6 = arith.constant 0 : index
    %14 = vector.load %arg3[%c0_4, %c0_5, %c0_6] : memref<3x8x32xf32, #tpu.memory_space<vmem>>, vector<1x8x32xf32>
    %15 = vector.shape_cast %14 : vector<1x8x32xf32> to vector<8x32xf32>
    %cst_7 = arith.constant dense<0.000000e+00> : vector<16x32xf32>
    %16 = tpu.matmul %13, %15, %cst_7 {dimension_numbers = #tpu.dot_dimension_numbers<[1], [0], [0], [1], [0, 0, 1, 1], [], []>} : vector<16x8xf32>, vector<8x32xf32>, vector<16x32xf32> -> vector<16x32xf32>
    %17 = arith.addf %4, %16 : vector<16x32xf32>
    %c1_i32 = arith.constant 1 : i32
    %18 = arith.addi %1, %c1_i32 : i32
    %c0_8 = arith.constant 0 : index
    %19 = arith.index_cast %18 : i32 to index
    %c0_9 = arith.constant 0 : index
    %20 = vector.load %arg2[%c0_8, %19, %c0_9] : memref<1x18x8xf32, #tpu.memory_space<vmem>>, vector<1x16x8xf32>
    %21 = vector.shape_cast %20 : vector<1x16x8xf32> to vector<16x8xf32>
    %cst_10 = arith.constant 0.000000e+00 : f32
    %22 = vector.broadcast %cst_10 : f32 to vector<16x8xf32>
    %23 = arith.cmpf oge, %21, %22 : vector<16x8xf32>
    %cst_11 = arith.constant 2.000000e-01 : f32
    %24 = vector.broadcast %cst_11 : f32 to vector<16x8xf32>
    %25 = arith.mulf %24, %21 : vector<16x8xf32>
    %26 = arith.select %23, %21, %25 : vector<16x8xi1>, vector<16x8xf32>
    %c1 = arith.constant 1 : index
    %c0_12 = arith.constant 0 : index
    %c0_13 = arith.constant 0 : index
    %27 = vector.load %arg3[%c1, %c0_12, %c0_13] : memref<3x8x32xf32, #tpu.memory_space<vmem>>, vector<1x8x32xf32>
    %28 = vector.shape_cast %27 : vector<1x8x32xf32> to vector<8x32xf32>
    %cst_14 = arith.constant dense<0.000000e+00> : vector<16x32xf32>
    %29 = tpu.matmul %26, %28, %cst_14 {dimension_numbers = #tpu.dot_dimension_numbers<[1], [0], [0], [1], [0, 0, 1, 1], [], []>} : vector<16x8xf32>, vector<8x32xf32>, vector<16x32xf32> -> vector<16x32xf32>
    %30 = arith.addf %17, %29 : vector<16x32xf32>
    %c2_i32 = arith.constant 2 : i32
    %31 = arith.addi %1, %c2_i32 : i32
    %c0_15 = arith.constant 0 : index
    %32 = arith.index_cast %31 : i32 to index
    %c0_16 = arith.constant 0 : index
    %33 = vector.load %arg2[%c0_15, %32, %c0_16] : memref<1x18x8xf32, #tpu.memory_space<vmem>>, vector<1x16x8xf32>
    %34 = vector.shape_cast %33 : vector<1x16x8xf32> to vector<16x8xf32>
    %cst_17 = arith.constant 0.000000e+00 : f32
    %35 = vector.broadcast %cst_17 : f32 to vector<16x8xf32>
    %36 = arith.cmpf oge, %34, %35 : vector<16x8xf32>
    %cst_18 = arith.constant 2.000000e-01 : f32
    %37 = vector.broadcast %cst_18 : f32 to vector<16x8xf32>
    %38 = arith.mulf %37, %34 : vector<16x8xf32>
    %39 = arith.select %36, %34, %38 : vector<16x8xi1>, vector<16x8xf32>
    %c2 = arith.constant 2 : index
    %c0_19 = arith.constant 0 : index
    %c0_20 = arith.constant 0 : index
    %40 = vector.load %arg3[%c2, %c0_19, %c0_20] : memref<3x8x32xf32, #tpu.memory_space<vmem>>, vector<1x8x32xf32>
    %41 = vector.shape_cast %40 : vector<1x8x32xf32> to vector<8x32xf32>
    %cst_21 = arith.constant dense<0.000000e+00> : vector<16x32xf32>
    %42 = tpu.matmul %39, %41, %cst_21 {dimension_numbers = #tpu.dot_dimension_numbers<[1], [0], [0], [1], [0, 0, 1, 1], [], []>} : vector<16x8xf32>, vector<8x32xf32>, vector<16x32xf32> -> vector<16x32xf32>
    %43 = arith.addf %30, %42 : vector<16x32xf32>
    %c0_22 = arith.constant 0 : index
    %c0_23 = arith.constant 0 : index
    %c0_24 = arith.constant 0 : index
    %44 = vector.load %arg5[%c0_22, %c0_23, %c0_24] : memref<1x16x32xf32, #tpu.memory_space<vmem>>, vector<1x16x32xf32>
    %45 = vector.shape_cast %44 : vector<1x16x32xf32> to vector<16x32xf32>
    %46 = vector.shape_cast %43 : vector<16x32xf32> to vector<1x16x32xf32>
    tpu.vector_store %arg5[%c0_22, %c0_23, %c0_24], %46 {strides = array<i32>} : memref<1x16x32xf32, #tpu.memory_space<vmem>>, vector<1x16x32xf32>,
    return
  }
  func.func @transform_0(%arg0: i32, %arg1: i32) -> (i32, i32, i32) {
    %c0_i32 = arith.constant 0 : i32
    %c0_i32_0 = arith.constant 0 : i32
    %c0_i32_1 = arith.constant 0 : i32
    return %arg0, %c0_i32, %c0_i32_0 : i32, i32, i32
  }
  func.func @transform_1(%arg0: i32, %arg1: i32) -> (i32, i32, i32) {
    %c0_i32 = arith.constant 0 : i32
    %c0_i32_0 = arith.constant 0 : i32
    %c0_i32_1 = arith.constant 0 : i32
    %c0_i32_2 = arith.constant 0 : i32
    return %c0_i32, %c0_i32_0, %c0_i32_1 : i32, i32, i32
  }
  func.func @transform_2(%arg0: i32, %arg1: i32) -> (i32, i32) {
    %c0_i32 = arith.constant 0 : i32
    %c0_i32_0 = arith.constant 0 : i32
    %c0_i32_1 = arith.constant 0 : i32
    return %c0_i32, %c0_i32_0 : i32, i32
  }
  func.func @transform_3(%arg0: i32, %arg1: i32) -> (i32, i32, i32) {
    %c0_i32 = arith.constant 0 : i32
    %c0_i32_0 = arith.constant 0 : i32
    return %arg0, %arg1, %c0_i32 : i32, i32, i32
  }
}

</mosaic_0001>

<llo_original>
// kernel: tpu_custom_call.1
$region0: #{tpu_custom_call.1}
  #allocation0 [shape = 'u32[]', space=smem, size = 0x4, offset = 0x4, fixed_abs, tag = 'smem constant byte address 0x4 - core index']
  #allocation1 [shape = 'u32[72,128]{1,0:T(1,128)}', space=vmem, size = 0x9000, scoped, tag = 'internal scratch']
  %s0 = inlined_call_operand.vmem [shape: f32[2,18,8], index: 0, kind: input, shape index: {}]
  %s1 = inlined_call_operand.vmem [shape: f32[3,8,32], index: 1, kind: input, shape index: {}]
  %s2 = inlined_call_operand.vmem [shape: f32[1,32], index: 2, kind: input, shape index: {}]
  %s3 = inlined_call_operand.hbm [shape: f32[2,16,32], index: 3, kind: output, shape index: {}]
  %s4 = sld [smem:[#allocation0]]
  $region45: #{tpu_custom_call.1} parent=0
    _
  %s6 = ssub.s32 1, %s4
  %s7 = scalar_select 0, %s6, %s4
  $region1: #{tpu_custom_call.1} parent=0
    #allocation2 [shape = 'u8[16384]{0}', space=vmem, size = 0x4000, scoped, tag = 'output window, operand 0']
    #allocation3 [shape = 's32[2]{0}', space=sflag, size = 0x8, scoped, tag = 'scoped memory for tpu_custom_call.1']
    %8 = vsyncpa [#allocation3], 0
    %s9 = scalar_lea.sflag [#allocation3], 1
    %10 = vsyncpa %s9, 0
    loop: start=0, step=1, limit=4
    $region2: #{tpu_custom_call.1} parent=1 // loop_pre_header
      _
    $region3: #{tpu_custom_call.1} parent=1 // loop_header
      %s12 = sphi 0, %s16
      %p13 = scmp.ge.s32.totalorder %s12, 4
      %s19 = sphi 0, %s31
      %s20 = sphi 0, %s27
      %s21 = sphi 0, %s19
      %s22 = sphi 0, %s20
      %s23 = sphi 0, %s21
      %s24 = sphi 0, %s22
      %s34 = sphi 0, %s36
      %s37 = sphi 0, %s34
      %s38 = sphi 0, %s37
      %s54 = sphi 0, %s38
      %s58 = sphi 0, %s58
      %s60 = sphi 0, %s58
      %s61 = sphi 0, %s60
      %s75 = sphi 0, %s61
      %s79 = sphi 0, %s79
      %s81 = sphi 0, %s79
      %s82 = sphi 0, %s81
      %s96 = sphi 0, %s82
      %s104 = sphi 0, %s106
      %s107 = sphi 0, %s104
      %s108 = sphi 0, %s107
      %s124 = sphi 0, %s108
    $region4: #{tpu_custom_call.1} parent=1 // loop_header_branch
      %15 = sbr.rel (%p13) target = $region8
    $region5: #{tpu_custom_call.1} parent=1 // loop_body
      %s17 = ssub.s32 %s12, 1
      %s18 = ssub.s32 %s12, 2
      %s25 = sadd.s32 1, %s20
      %p26 = scmp.ge.s32.totalorder %s25, 1
      %s27 = scalar_select %p26, 0, %s25
      %s28 = sadd.s32 1, %s19
      %s29 = scalar_select %p26, %s28, %s19
      %p30 = scmp.ge.s32.totalorder %s29, 2
      %s31 = scalar_select %p30, 0, %s29
      %s32 = ssub.s32 %s19, %s31
      %p33 = scmp.eq.s32.totalorder %s32, 0
      %s35 = sadd.s32 %s34, 1
      %s36 = scalar_select %p33, %s34, %s35
      %p39 = pneg %p33
      %p40 = scmp.eq.s32.totalorder %s12, 1
      %p41 = por %p39, %p40
      %p42 = scmp.ne.s32.totalorder %s34, %s37
      %p43 = scmp.eq.s32.totalorder %s12, 0
      %p44 = por %p42, %p43
      %p45 = scmp.ne.s32.totalorder %s34, %s37
      %p46 = scmp.eq.s32.totalorder %s17, 1
      %p47 = por %p45, %p46
      %p48 = scmp.ne.s32.totalorder %s37, %s38
      %p49 = scmp.eq.s32.totalorder %s17, 0
      %p50 = por %p48, %p49
      %p51 = scmp.ne.s32.totalorder %s37, %s38
      %p52 = scmp.eq.s32.totalorder %s18, 1
      %p53 = por %p51, %p52
      %p55 = scmp.ne.s32.totalorder %s38, %s54
      %p56 = scmp.eq.s32.totalorder %s18, 0
      %p57 = por %p55, %p56
      %s59 = sadd.s32 %s58, 1
      %p62 = scmp.eq.s32.totalorder %s12, 1
      %p63 = scmp.ne.s32.totalorder %s58, %s60
      %p64 = scmp.eq.s32.totalorder %s12, 0
      %p65 = por %p63, %p64
      %p66 = scmp.ne.s32.totalorder %s58, %s60
      %p67 = scmp.eq.s32.totalorder %s17, 1
      %p68 = por %p66, %p67
      %p69 = scmp.ne.s32.totalorder %s60, %s61
      %p70 = scmp.eq.s32.totalorder %s17, 0
      %p71 = por %p69, %p70
      %p72 = scmp.ne.s32.totalorder %s60, %s61
      %p73 = scmp.eq.s32.totalorder %s18, 1
      %p74 = por %p72, %p73
      %p76 = scmp.ne.s32.totalorder %s61, %s75
      %p77 = scmp.eq.s32.totalorder %s18, 0
      %p78 = por %p76, %p77
      %s80 = sadd.s32 %s79, 1
      %p83 = scmp.eq.s32.totalorder %s12, 1
      %p84 = scmp.ne.s32.totalorder %s79, %s81
      %p85 = scmp.eq.s32.totalorder %s12, 0
      %p86 = por %p84, %p85
      %p87 = scmp.ne.s32.totalorder %s79, %s81
      %p88 = scmp.eq.s32.totalorder %s17, 1
      %p89 = por %p87, %p88
      %p90 = scmp.ne.s32.totalorder %s81, %s82
      %p91 = scmp.eq.s32.totalorder %s17, 0
      %p92 = por %p90, %p91
      %p93 = scmp.ne.s32.totalorder %s81, %s82
      %p94 = scmp.eq.s32.totalorder %s18, 1
      %p95 = por %p93, %p94
      %p97 = scmp.ne.s32.totalorder %s82, %s96
      %p98 = scmp.eq.s32.totalorder %s18, 0
      %p99 = por %p97, %p98
      %s100 = ssub.s32 %s19, %s31
      %s101 = ssub.s32 %s20, %s27
      %s102 = sor.u32 %s100, %s101
      %p103 = scmp.eq.s32.totalorder %s102, 0
      %s105 = sadd.s32 %s104, 1
      %s106 = scalar_select %p103, %s104, %s105
      %p109 = pneg %p103
      %p110 = scmp.eq.s32.totalorder %s12, 1
      %p111 = por %p109, %p110
      %p112 = scmp.ne.s32.totalorder %s104, %s107
      %p113 = scmp.eq.s32.totalorder %s12, 0
      %p114 = por %p112, %p113
      %p115 = scmp.ne.s32.totalorder %s104, %s107
      %p116 = scmp.eq.s32.totalorder %s17, 1
      %p117 = por %p115, %p116
      %p118 = scmp.ne.s32.totalorder %s107, %s108
      %p119 = scmp.eq.s32.totalorder %s17, 0
      %p120 = por %p118, %p119
      %p121 = scmp.ne.s32.totalorder %s107, %s108
      %p122 = scmp.eq.s32.totalorder %s18, 1
      %p123 = por %p121, %p122
      %p125 = scmp.ne.s32.totalorder %s108, %s124
      %p126 = scmp.eq.s32.totalorder %s18, 0
      %p127 = por %p125, %p126
      %p128 = scmp.le.s32.totalorder 1, %s12
      %p129 = scmp.lt.s32.totalorder %s12, 3
      %p130 = pnand %p128, %p129
      %p131 = pneg %p130
      // Predicated region
      $region9: #{tpu_custom_call.1} parent=5 // pred_check
        _
      $region10: #{tpu_custom_call.1} parent=5 // pred_check_branch
        %133 = sbr.rel (%p130) target = $region12
      $region11: #{tpu_custom_call.1} parent=5 // pred_region
        %s134 = ssub.s32 %s12, 1
        // Predicated region
        $region13: #{tpu_custom_call.1} parent=11 // pred_check
          %p135 = pneg %p71
        $region14: #{tpu_custom_call.1} parent=11 // pred_check_branch
          %137 = sbr.rel (%p135) target = $region16
        $region15: #{tpu_custom_call.1} parent=11 // pred_region
          _
        $region16: #{tpu_custom_call.1} parent=11 // pred_fallthru
          _
        // Predicated region
        $region17: #{tpu_custom_call.1} parent=11 // pred_check
          %p138 = pneg %p92
        $region18: #{tpu_custom_call.1} parent=11 // pred_check_branch
          %140 = sbr.rel (%p138) target = $region20
        $region19: #{tpu_custom_call.1} parent=11 // pred_region
          _
        $region20: #{tpu_custom_call.1} parent=11 // pred_fallthru
          _
      $region12: #{tpu_custom_call.1} parent=5 // pred_fallthru
        _
      %p141 = scmp.lt.s32.totalorder %s12, 2
      // Predicated region
      $region21: #{tpu_custom_call.1} parent=5 // pred_check
        %p142 = pneg %p141
      $region22: #{tpu_custom_call.1} parent=5 // pred_check_branch
        %144 = sbr.rel (%p142) target = $region24
      $region23: #{tpu_custom_call.1} parent=5 // pred_region
        // Predicated region
        $region25: #{tpu_custom_call.1} parent=23 // pred_check
          %p145 = pneg %p44
        $region26: #{tpu_custom_call.1} parent=23 // pred_check_branch
          %147 = sbr.rel (%p145) target = $region28
        $region27: #{tpu_custom_call.1} parent=23 // pred_region
          %p148 = scmp.lt.s32.totalorder %s19, 1
          %s149 = scalar_select %p148, %s19, 1
          %s150 = smul.addr %s149, 3
          %s151 = smul.addr %s150, 8
          %s152 = scalar_lea.vmem %s0, %s151
        $region28: #{tpu_custom_call.1} parent=23 // pred_fallthru
          _
      $region24: #{tpu_custom_call.1} parent=5 // pred_fallthru
        _
      %p153 = scmp.le.s32.totalorder 1, %s12
      %p154 = scmp.lt.s32.totalorder %s12, 3
      %p155 = pnand %p153, %p154
      %p156 = pneg %p155
      // Predicated region
      $region29: #{tpu_custom_call.1} parent=5 // pred_check
        _
      $region30: #{tpu_custom_call.1} parent=5 // pred_check_branch
        %158 = sbr.rel (%p155) target = $region32
      $region31: #{tpu_custom_call.1} parent=5 // pred_region
        %s159 = ssub.s32 %s12, 1
        %p160 = scmp.lt.s32.totalorder %s21, 1
        %s161 = scalar_select %p160, %s21, 1
        %s162 = smul.addr %s161, 3
        %s163 = smul.addr %s162, 8
        %s164 = scalar_lea.vmem %s0, %s163
        %p165 = pneg %p50
        %p166 = pneg %p47
        %p167 = pneg %p71
        %p168 = pneg %p68
        %p169 = pneg %p92
        %p170 = pneg %p89
        %p171 = pneg %p120
        %p172 = pneg %p117
        %s173 = sand.u32 %s107, 1
        %s174 = scalar_lea.sflag [#allocation3], %s173
        %s175 = sand.u32 %s107, 1
        %s176 = smul.addr %s175, 16
        %s177 = scalar_lea.vmem [#allocation2], %s176
        %p178 = scmp.lt.s32.totalorder %s21, 1
        %s179 = scalar_select %p178, %s21, 1
        %s180 = smul.addr %s179, 3
        %s181 = smul.addr %s180, 8
        %s182 = scalar_lea.vmem %s0, %s181
        %s183 = smul.u32 2, %s22
        %s184 = smul.u32 %s22, 16
        %v185 = vld [vmem:[%s2] sm:$0x1]
        %v187 = vperm.slane %v185, 0
        %s189 = scalar_lea.vmem %s182, %s184
        %v190 = vld [vmem:[%s189] sm:$0xff]
        %v191 = vld [vmem:[%s189 + $0x8] sm:$0xff]
        %vm192 = vcmp.ge.f32.partialorder %v190, 0.0
        %vm193 = vcmp.ge.f32.partialorder %v191, 0.0
        %v194 = vmul.f32 %v190, 0.2
        %v195 = vmul.f32 %v191, 0.2
        %v196 = vsel %vm192, %v190, %v194
        %v197 = vsel %vm193, %v191, %v195
        %v198 = vld [vmem:[%s1] sm:$0xff]
        %vm199 = vcmask 64512
        %v201 = vsel %vm199, %v196, 0
        %v204 = vsel %vm199, %v197, 0
        %206 = vmatpush.msra.mxu0 0.0
        %207 = vmatpush.msra.mxu0 0.0
        %208 = vmatpush.msra.mxu0 0.0
        %209 = vmatpush.msra.mxu0 0.0
        %210 = vmatpush.msra.mxu0 0.0
        %211 = vmatpush.msra.mxu0 0.0
        %212 = vmatpush.msra.mxu0 0.0
        %213 = vmatpush.msra.mxu0 0.0
        %214 = vmatpush.msra.mxu0 0.0
        %215 = vmatpush.msra.mxu0 0.0
        %216 = vmatpush.msra.mxu0 0.0
        %217 = vmatpush.msra.mxu0 0.0
        %218 = vmatpush.msra.mxu0 0.0
        %219 = vmatpush.msra.mxu0 0.0
        %220 = vmatpush.msra.mxu0 0.0
        %221 = vmatpush.msra.mxu0 %v198
        %222 = vmatmul.f32.gmra.mxu0 %v201
        %v223 = vpop.f32.mrf.mxu0
        %v224 = vadd.f32 0.0, %v223
        %225 = vmatmul.f32.gmra.mxu0 %v204
        %v226 = vpop.f32.mrf.mxu0
        %v227 = vadd.f32 0.0, %v226
        %228 = vdwg.mxu0
        %v229 = vadd.f32 %v187, %v224
        %v230 = vadd.f32 %v187, %v227
        %s231 = sadd.s32 %s184, 1
        %s232 = scalar_lea.vmem %s182, %s231
        %v233 = vld [vmem:[%s232] sm:$0xff]
        %v234 = vld [vmem:[%s232 + $0x8] sm:$0xff]
        %vm235 = vcmp.ge.f32.partialorder %v233, 0.0
        %vm236 = vcmp.ge.f32.partialorder %v234, 0.0
        %v237 = vmul.f32 %v233, 0.2
        %v238 = vmul.f32 %v234, 0.2
        %v239 = vsel %vm235, %v233, %v237
        %v240 = vsel %vm236, %v234, %v238
        %s241 = scalar_lea.vmem %s1, 8
        %v242 = vld [vmem:[%s241] sm:$0xff]
        %v244 = vsel %vm199, %v239, 0
        %v247 = vsel %vm199, %v240, 0
        %249 = vmatpush.msra.mxu0 0.0
        %250 = vmatpush.msra.mxu0 0.0
        %251 = vmatpush.msra.mxu0 0.0
        %252 = vmatpush.msra.mxu0 0.0
        %253 = vmatpush.msra.mxu0 0.0
        %254 = vmatpush.msra.mxu0 0.0
        %255 = vmatpush.msra.mxu0 0.0
        %256 = vmatpush.msra.mxu0 0.0
        %257 = vmatpush.msra.mxu0 0.0
        %258 = vmatpush.msra.mxu0 0.0
        %259 = vmatpush.msra.mxu0 0.0
        %260 = vmatpush.msra.mxu0 0.0
        %261 = vmatpush.msra.mxu0 0.0
        %262 = vmatpush.msra.mxu0 0.0
        %263 = vmatpush.msra.mxu0 0.0
        %264 = vmatpush.msra.mxu0 %v242
        %265 = vmatmul.f32.gmra.mxu0 %v244
        %v266 = vpop.f32.mrf.mxu0
        %v267 = vadd.f32 0.0, %v266
        %268 = vmatmul.f32.gmra.mxu0 %v247
        %v269 = vpop.f32.mrf.mxu0
        %v270 = vadd.f32 0.0, %v269
        %271 = vdwg.mxu0
        %v272 = vadd.f32 %v229, %v267
        %v273 = vadd.f32 %v230, %v270
        %s274 = sadd.s32 %s184, 2
        %s275 = scalar_lea.vmem %s182, %s274
        %v276 = vld [vmem:[%s275] sm:$0xff]
        %v277 = vld [vmem:[%s275 + $0x8] sm:$0xff]
        %vm278 = vcmp.ge.f32.partialorder %v276, 0.0
        %vm279 = vcmp.ge.f32.partialorder %v277, 0.0
        %v280 = vmul.f32 %v276, 0.2
        %v281 = vmul.f32 %v277, 0.2
        %v282 = vsel %vm278, %v276, %v280
        %v283 = vsel %vm279, %v277, %v281
        %s284 = scalar_lea.vmem %s1, 16
        %v285 = vld [vmem:[%s284] sm:$0xff]
        %v287 = vsel %vm199, %v282, 0
        %v290 = vsel %vm199, %v283, 0
        %292 = vmatpush.msra.mxu0 0.0
        %293 = vmatpush.msra.mxu0 0.0
        %294 = vmatpush.msra.mxu0 0.0
        %295 = vmatpush.msra.mxu0 0.0
        %296 = vmatpush.msra.mxu0 0.0
        %297 = vmatpush.msra.mxu0 0.0
        %298 = vmatpush.msra.mxu0 0.0
        %299 = vmatpush.msra.mxu0 0.0
        %300 = vmatpush.msra.mxu0 0.0
        %301 = vmatpush.msra.mxu0 0.0
        %302 = vmatpush.msra.mxu0 0.0
        %303 = vmatpush.msra.mxu0 0.0
        %304 = vmatpush.msra.mxu0 0.0
        %305 = vmatpush.msra.mxu0 0.0
        %306 = vmatpush.msra.mxu0 0.0
        %307 = vmatpush.msra.mxu0 %v285
        %308 = vmatmul.f32.gmra.mxu0 %v287
        %v309 = vpop.f32.mrf.mxu0
        %v310 = vadd.f32 0.0, %v309
        %311 = vmatmul.f32.gmra.mxu0 %v290
        %v312 = vpop.f32.mrf.mxu0
        %v313 = vadd.f32 0.0, %v312
        %314 = vdwg.mxu0
        %v315 = vadd.f32 %v272, %v310
        %v316 = vadd.f32 %v273, %v313
        %vm317 = vcmask 261120
        %318 = vst.msk [vmem:[%s177] sm:$0xff] %vm317, %v315
        %319 = vst.msk [vmem:[%s177 + $0x8] sm:$0xff] %vm317, %v316
        %s320 = sand.u32 %s107, 1
        %s321 = scalar_lea.sflag [#allocation3], %s320
        %s322 = sand.u32 %s107, 1
        %s323 = smul.addr %s322, 16
        %s324 = scalar_lea.vmem [#allocation2], %s323
        // Predicated region
        $region33: #{tpu_custom_call.1} parent=31 // pred_check
          %p325 = pneg %p117
        $region34: #{tpu_custom_call.1} parent=31 // pred_check_branch
          %327 = sbr.rel (%p325) target = $region36
        $region35: #{tpu_custom_call.1} parent=31 // pred_region
          %s328 = smul.u32 2, %s22
          %330 = vsyncadd %s321, 0
          %s331 = smul.addr %s21, 2
          %s332 = sadd.s32 %s328, %s331
          %s333 = smul.addr %s332, 8
          %s334 = scalar_lea.hbm %s3, %s333
          %s335 = sshll.u32 %s324, 4
          %s336 = int_to_ptr.vmem [resolvable:$true] %s335
          %s337 = sshll.u32 %s334, 4
          %s338 = int_to_ptr.hbm [resolvable:$true] %s337
          %343 = dma.vmem_to_hbm [thread:$0]  %s336, 256, %s338, %s321, 128, 128, 8
        $region36: #{tpu_custom_call.1} parent=31 // pred_fallthru
          _
      $region32: #{tpu_custom_call.1} parent=5 // pred_fallthru
        _
      %p344 = scmp.le.s32.totalorder 2, %s12
      // Predicated region
      $region37: #{tpu_custom_call.1} parent=5 // pred_check
        %p345 = pneg %p344
      $region38: #{tpu_custom_call.1} parent=5 // pred_check_branch
        %347 = sbr.rel (%p345) target = $region40
      $region39: #{tpu_custom_call.1} parent=5 // pred_region
        %s348 = ssub.s32 %s12, 2
        // Predicated region
        $region41: #{tpu_custom_call.1} parent=39 // pred_check
          %p349 = pneg %p123
        $region42: #{tpu_custom_call.1} parent=39 // pred_check_branch
          %351 = sbr.rel (%p349) target = $region44
        $region43: #{tpu_custom_call.1} parent=39 // pred_region
          %s352 = sand.u32 %s108, 1
          %s353 = scalar_lea.sflag [#allocation3], %s352
          %s354 = sand.u32 %s108, 1
          %s355 = smul.addr %s354, 16
          %s356 = scalar_lea.vmem [#allocation2], %s355
          %358 = dma.done %s353, 256
        $region44: #{tpu_custom_call.1} parent=39 // pred_fallthru
          _
      $region40: #{tpu_custom_call.1} parent=5 // pred_fallthru
        _
    $region6: #{tpu_custom_call.1} parent=1 // loop_footer
      %s16 = sadd.s32 1, %s12
    $region7: #{tpu_custom_call.1} parent=1 // loop_footer_branch
      %11 = sbr.rel target = $region3
    $region8: #{tpu_custom_call.1} parent=1 // loop_exit
      _
    %359 = vsyncpa [#allocation3], 1
    %s360 = scalar_lea.sflag [#allocation3], 1
    %361 = vsyncpa %s360, 1

</llo_original>
